<compile_context>
chip_gen: v7x
topology: tpu7x:2x2x1
jax: 0.10.0
libtpu: 0.0.40
codegen_flags: <defaults>
</compile_context>

<pallas_src>
import jax
import jax.numpy as jnp
from jax.experimental import pallas as pl
from jax.experimental.pallas import tpu as pltpu


def _round_up(a: int, m: int) -> int:
    return (a + m - 1) // m * m


def _cdiv(a: int, m: int) -> int:
    return -(-a // m)


def _spatial_fc_kernel(x_ref, w_ref, b_ref, o_ref):
    # x_ref: (N, TC)  lane-dense slab of fused (batch*feature) columns
    # w_ref: (N, N)   fc.weight (PyTorch: out_features x in_features), resident
    # b_ref: (N, 1)   fc.bias as a column (broadcasts over lanes)
    # o_ref: (N, TC)
    y = jnp.dot(w_ref[...], x_ref[...], preferred_element_type=jnp.float32)
    y = y + b_ref[...]                 # (N, 1) broadcast over TC lanes
    o_ref[...] = y.astype(o_ref.dtype)  # single cast at the store


def spatial_fc(x, weight, bias, *, tile_bytes=2 * 1024 * 1024):
    """x: (B, N, D); weight: (N, N); bias: (N,) -> (B, N, D)."""
    B, N, D = x.shape
    C = B * D
    itemsize = jnp.dtype(x.dtype).itemsize

    # ---- lane-tile selection (tile-count first, ragged last block) --------
    tc_cap = max(512, (tile_bytes // (N * itemsize)) // 128 * 128)
    if C < 256:
        # Single full-extent block (lane dim == full array dim is always legal,
        # even when it is not a multiple of 128).
        TC = C
        num_tiles = 1
    else:
        # >= 2 tiles and an even count so both v7x TensorCores get balanced
        # work; more tiles only if the byte budget requires it.
        num_tiles = max(2, _cdiv(C, tc_cap))
        num_tiles += num_tiles % 2
        TC = _round_up(_cdiv(C, num_tiles), 128)
        num_tiles = _cdiv(C, TC)       # ragged last block, no lane padding

    # ---- layout plumbing: fuse batch & feature into the lane dim ----------
    # x2[m, b*D + d] = x[b, m, d]; the reshape is a free minor-dim merge, the
    # transpose is the single unavoidable HBM copy on the input side.
    x2 = jnp.transpose(x, (1, 0, 2)).reshape(N, C)
    b2 = bias.reshape(N, 1)

    cost = pl.CostEstimate(
        flops=2 * N * N * C,
        transcendentals=0,
        bytes_accessed=(2 * N * C + N * N + N) * itemsize,
    )

    out = pl.pallas_call(
        _spatial_fc_kernel,
        out_shape=jax.ShapeDtypeStruct((N, C), x.dtype),
        grid_spec=pltpu.PrefetchScalarGridSpec(
            num_scalar_prefetch=0,
            grid=(num_tiles,),
            in_specs=[
                pl.BlockSpec((N, TC), lambda i: (0, i)),   # lane-dense x slab
                pl.BlockSpec((N, N), lambda i: (0, 0)),    # resident weight
                pl.BlockSpec((N, 1), lambda i: (0, 0)),    # resident bias
            ],
            out_specs=pl.BlockSpec((N, TC), lambda i: (0, i)),
        ),
        compiler_params=pltpu.CompilerParams(
            dimension_semantics=("parallel",),
            vmem_limit_bytes=32 * 1024 * 1024,
        ),
        cost_estimate=cost,
    )(x2, weight, b2)

    # Free minor-dim split, then the single unavoidable output-side copy.
    return jnp.transpose(out.reshape(N, B, D), (1, 0, 2))


if __name__ == "__main__":
    # Small shapes consistent with the module: batch=2, spatial dim n=16, feature d=32.
    B, N, D = 2, 16, 32

    key = jax.random.PRNGKey(0)
    kx, kw, kb = jax.random.split(key, 3)

    x = jax.random.normal(kx, (B, N, D), dtype=jnp.float32)
    # Deterministic synthetic params for nn.Linear(N, N): weight (N, N), bias (N,)
    bound = 1.0 / (N ** 0.5)
    weight = jax.random.uniform(kw, (N, N), minval=-bound, maxval=bound,
                                dtype=jnp.float32)
    bias = jax.random.uniform(kb, (N,), minval=-bound, maxval=bound,
                              dtype=jnp.float32)

    fn = jax.jit(spatial_fc)
    out = jax.block_until_ready(fn(x, weight, bias))

    # Pure-JAX reference of the PyTorch forward (transpose -> linear -> transpose back).
    ref = jnp.einsum("bmd,nm->bnd", x, weight,
                     preferred_element_type=jnp.float32) + bias[None, :, None]

    assert out.shape == (B, N, D)
    assert jnp.allclose(out, ref, atol=1e-5, rtol=1e-5)
    print("KERNEL_OK")
</pallas_src>

<mosaic_0001>
module attributes {stable_mosaic.version = 11 : i64} {
  func.func @_spatial_fc_kernel(%arg0: i32, %arg1: memref<16x64xf32, #tpu.memory_space<vmem>>, %arg2: memref<16x16xf32, #tpu.memory_space<vmem>>, %arg3: memref<16x1xf32, #tpu.memory_space<vmem>>, %arg4: memref<16x64xf32, #tpu.memory_space<vmem>>) attributes {dimension_semantics = [#tpu.dimension_semantics<parallel>], iteration_bounds = array<i64: 1>, scalar_prefetch = 0 : i64, scratch_operands = 0 : i64, tpu.core_type = #tpu.core_type<tc>, window_params = [{transform_indices = @transform_0, window_bounds = array<i64: 16, 64>}, {pipeline_mode = #tpu.pipeline_mode<synchronous>, transform_indices = @transform_1, window_bounds = array<i64: 16, 16>}, {pipeline_mode = #tpu.pipeline_mode<synchronous>, transform_indices = @transform_2, window_bounds = array<i64: 16, 1>}, {transform_indices = @transform_3, window_bounds = array<i64: 16, 64>}]} {
    %c0 = arith.constant 0 : index
    %c0_0 = arith.constant 0 : index
    %0 = vector.load %arg2[%c0, %c0_0] : memref<16x16xf32, #tpu.memory_space<vmem>>, vector<16x16xf32>
    %c0_1 = arith.constant 0 : index
    %c0_2 = arith.constant 0 : index
    %1 = vector.load %arg1[%c0_1, %c0_2] : memref<16x64xf32, #tpu.memory_space<vmem>>, vector<16x64xf32>
    %cst = arith.constant dense<0.000000e+00> : vector<16x64xf32>
    %2 = tpu.matmul %0, %1, %cst {dimension_numbers = #tpu.dot_dimension_numbers<[1], [0], [0], [1], [0, 0, 1, 1], [], []>} : vector<16x16xf32>, vector<16x64xf32>, vector<16x64xf32> -> vector<16x64xf32>
    %c0_3 = arith.constant 0 : index
    %c0_4 = arith.constant 0 : index
    %3 = vector.load %arg3[%c0_3, %c0_4] : memref<16x1xf32, #tpu.memory_space<vmem>>, vector<16x1xf32>
    %4 = vector.broadcast %3 : vector<16x1xf32> to vector<16x64xf32>
    %5 = arith.addf %2, %4 : vector<16x64xf32>
    %c0_5 = arith.constant 0 : index
    %c0_6 = arith.constant 0 : index
    %6 = vector.load %arg4[%c0_5, %c0_6] : memref<16x64xf32, #tpu.memory_space<vmem>>, vector<16x64xf32>
    tpu.vector_store %arg4[%c0_5, %c0_6], %5 {strides = array<i32>} : memref<16x64xf32, #tpu.memory_space<vmem>>, vector<16x64xf32>,
    return
  }
  func.func @transform_0(%arg0: i32) -> (i32, i32) {
    %c0_i32 = arith.constant 0 : i32
    %c0_i32_0 = arith.constant 0 : i32
    return %c0_i32, %arg0 : i32, i32
  }
  func.func @transform_1(%arg0: i32) -> (i32, i32) {
    %c0_i32 = arith.constant 0 : i32
    %c0_i32_0 = arith.constant 0 : i32
    %c0_i32_1 = arith.constant 0 : i32
    return %c0_i32, %c0_i32_0 : i32, i32
  }
  func.func @transform_2(%arg0: i32) -> (i32, i32) {
    %c0_i32 = arith.constant 0 : i32
    %c0_i32_0 = arith.constant 0 : i32
    %c0_i32_1 = arith.constant 0 : i32
    return %c0_i32, %c0_i32_0 : i32, i32
  }
  func.func @transform_3(%arg0: i32) -> (i32, i32) {
    %c0_i32 = arith.constant 0 : i32
    %c0_i32_0 = arith.constant 0 : i32
    return %c0_i32, %arg0 : i32, i32
  }
}

</mosaic_0001>

<llo_original>
// kernel: spatial_fc.1
$region0: #{spatial_fc.1}
  #allocation0 [shape = 'u32[]', space=smem, size = 0x4, offset = 0x4, fixed_abs, tag = 'smem constant byte address 0x4 - core index']
  #allocation1 [shape = 'u32[144,128]{1,0:T(1,128)}', space=vmem, size = 0x12000, scoped, tag = 'internal scratch']
  %s0 = inlined_call_operand.vmem [shape: f32[16,64], index: 0, kind: input, shape index: {}]
  %s1 = inlined_call_operand.vmem [shape: f32[16,16], index: 1, kind: input, shape index: {}]
  %s2 = inlined_call_operand.vmem [shape: f32[16,1], index: 2, kind: input, shape index: {}]
  %s3 = inlined_call_operand.vmem [shape: f32[16,64], index: 3, kind: output, shape index: {}]
  %s4 = sld [smem:[#allocation0]]
  $region22: #{spatial_fc.1} parent=0
    _
  %s6 = ssub.s32 1, %s4
  %s7 = scalar_select 0, %s6, %s4
  // Predicated region
  $region2: #{spatial_fc.1} parent=0 // pred_check
    _
  $region3: #{spatial_fc.1} parent=0 // pred_check_branch
    %9 = sbr.rel (0) target = $region5
  $region4: #{spatial_fc.1} parent=0 // pred_region
    _
  $region5: #{spatial_fc.1} parent=0 // pred_fallthru
    _
  // Predicated region
  $region6: #{spatial_fc.1} parent=0 // pred_check
    _
  $region7: #{spatial_fc.1} parent=0 // pred_check_branch
    %11 = sbr.rel (0) target = $region9
  $region8: #{spatial_fc.1} parent=0 // pred_region
    _
  $region9: #{spatial_fc.1} parent=0 // pred_fallthru
    _
  // Predicated region
  $region10: #{spatial_fc.1} parent=0 // pred_check
    _
  $region11: #{spatial_fc.1} parent=0 // pred_check_branch
    %13 = sbr.rel (0) target = $region13
  $region12: #{spatial_fc.1} parent=0 // pred_region
    _
  $region13: #{spatial_fc.1} parent=0 // pred_fallthru
    _
  %v14 = vld [vmem:[%s1] sm:$0xff]
  %v15 = vld [vmem:[%s1 + $0x8] sm:$0xff]
  %v16 = vld [vmem:[%s0] sm:$0xff]
  %v17 = vld [vmem:[%s0 + $0x8] sm:$0xff]
  %v18 = vld [vmem:[%s2] sm:$0xff]
  %v19 = vld [vmem:[%s2 + $0x8] sm:$0xff]
  %21 = vset.pattern.permute.xlu0 0
  %22 = vperm.xlu0 %21, %v18
  %v23 = vpop.permute.xlu0 %22
  %26 = vset.pattern.permute.xlu0 0
  %27 = vperm.xlu0 %26, %v19
  %v28 = vpop.permute.xlu0 %27
  %vm30 = vcmask 130048
  %v32 = vsel %vm30, %v14, 0
  %v35 = vsel %vm30, %v15, 0
  %37 = vmatprep.subr.mxu0 0.0
  %38 = vmatpush1.msra.mxu0 %v16
  %39 = vmatprep.subr.mxu0 0.0
  %40 = vmatpush1.msra.mxu0 %v17
  %41 = vmatprep.subr.mxu0 0.0
  %42 = vmatpush1.msra.mxu0 0.0
  %43 = vmatprep.subr.mxu0 0.0
  %44 = vmatpush1.msra.mxu0 0.0
  %45 = vmatprep.subr.mxu0 0.0
  %46 = vmatpush1.msra.mxu0 0.0
  %47 = vmatprep.subr.mxu0 0.0
  %48 = vmatpush1.msra.mxu0 0.0
  %49 = vmatprep.subr.mxu0 0.0
  %50 = vmatpush1.msra.mxu0 0.0
  %51 = vmatprep.subr.mxu0 0.0
  %52 = vmatpush1.msra.mxu0 0.0
  %53 = vmatprep.subr.mxu0 0.0
  %54 = vmatpush1.msra.mxu0 0.0
  %55 = vmatprep.subr.mxu0 0.0
  %56 = vmatpush1.msra.mxu0 0.0
  %57 = vmatprep.subr.mxu0 0.0
  %58 = vmatpush1.msra.mxu0 0.0
  %59 = vmatprep.subr.mxu0 0.0
  %60 = vmatpush1.msra.mxu0 0.0
  %61 = vmatprep.subr.mxu0 0.0
  %62 = vmatpush1.msra.mxu0 0.0
  %63 = vmatprep.subr.mxu0 0.0
  %64 = vmatpush1.msra.mxu0 0.0
  %65 = vmatprep.subr.mxu0 0.0
  %66 = vmatpush1.msra.mxu0 0.0
  %67 = vmatprep.subr.mxu0 0.0
  %68 = vmatpush1.msra.mxu0 0.0
  %69 = vmatprep.subr.mxu0 0.0
  %70 = vmatpush1.msra.mxu0 0.0
  %71 = vmatprep.subr.mxu0 0.0
  %72 = vmatpush1.msra.mxu0 0.0
  %73 = vmatprep.subr.mxu0 0.0
  %74 = vmatpush1.msra.mxu0 0.0
  %75 = vmatprep.subr.mxu0 0.0
  %76 = vmatpush1.msra.mxu0 0.0
  %77 = vmatprep.subr.mxu0 0.0
  %78 = vmatpush1.msra.mxu0 0.0
  %79 = vmatprep.subr.mxu0 0.0
  %80 = vmatpush1.msra.mxu0 0.0
  %81 = vmatprep.subr.mxu0 0.0
  %82 = vmatpush1.msra.mxu0 0.0
  %83 = vmatprep.subr.mxu0 0.0
  %84 = vmatpush1.msra.mxu0 0.0
  %85 = vmatprep.subr.mxu0 0.0
  %86 = vmatpush1.msra.mxu0 0.0
  %87 = vmatprep.subr.mxu0 0.0
  %88 = vmatpush1.msra.mxu0 0.0
  %89 = vmatprep.subr.mxu0 0.0
  %90 = vmatpush1.msra.mxu0 0.0
  %91 = vmatprep.subr.mxu0 0.0
  %92 = vmatpush1.msra.mxu0 0.0
  %93 = vmatprep.subr.mxu0 0.0
  %94 = vmatpush1.msra.mxu0 0.0
  %95 = vmatprep.subr.mxu0 0.0
  %96 = vmatpush1.msra.mxu0 0.0
  %97 = vmatprep.subr.mxu0 0.0
  %98 = vmatpush1.msra.mxu0 0.0
  %99 = vmatprep.subr.mxu0 0.0
  %100 = vmatpush1.msra.mxu0 0.0
  %101 = vmatprep.mubr.f32.mxu0 0.0
  %102 = vmatmul.mubr.f32.gmra.mrb[0].mxu0 %v32
  %v103 = vpop.f32.mrb[0].mxu0
  %v104 = vadd.f32 %v23, %v103
  %v105 = vpop.f32.mrb[0].mxu0
  %106 = vmatprep.mubr.f32.mxu0 0.0
  %107 = vmatmul.mubr.f32.gmra.mrb[0].mxu0 %v35
  %v108 = vpop.f32.mrb[0].mxu0
  %v109 = vadd.f32 %v28, %v108
  %v110 = vpop.f32.mrb[0].mxu0
  %111 = vdwg.mxu0
  %vm112 = vcmask 523264
  %113 = vst.msk [vmem:[%s3] sm:$0xff] %vm112, %v104
  %114 = vst.msk [vmem:[%s3 + $0x8] sm:$0xff] %vm112, %v109
  // Predicated region
  $region14: #{spatial_fc.1} parent=0 // pred_check
    _
  $region15: #{spatial_fc.1} parent=0 // pred_check_branch
    %116 = sbr.rel (0) target = $region17
  $region16: #{spatial_fc.1} parent=0 // pred_region
    _
  $region17: #{spatial_fc.1} parent=0 // pred_fallthru
    _
  // Predicated region
  $region18: #{spatial_fc.1} parent=0 // pred_check
    _
  $region19: #{spatial_fc.1} parent=0 // pred_check_branch
    %118 = sbr.rel (0) target = $region21
  $region20: #{spatial_fc.1} parent=0 // pred_region
    _
  $region21: #{spatial_fc.1} parent=0 // pred_fallthru
    _

</llo_original>
